<compile_context>
chip_gen: v6e
topology: v6e:2x2x1
jax: 0.10.0
libtpu: 0.0.40
codegen_flags: <defaults>
</compile_context>

<pallas_src>
import functools

import jax
import jax.numpy as jnp
from jax import lax
from jax.experimental import pallas as pl
from jax.experimental.pallas import tpu as pltpu

_SMALL_D_MAX = 16                  # counting is ~O(D^2)/row; crossover vs bisection ~D=20
_BISECT_ITERS = 24                 # 2^-24 ~ 6e-8 bracket; exact support recompute absorbs it
_COUNT_TILE_BYTES = 1 << 20        # ~1 MiB of f32 work per tile for the tiny-D counting path
_BISECT_TILE_BYTES_1TC = 4 << 20   # v5e/v6e: compute-bound, DMA hidden, big tiles
_BISECT_TILE_BYTES_SMALL = 2 << 20 # v7x (32 MiB scoped default) or unknown chip


def _round_up(a, b):
    return ((a + b - 1) // b) * b


def _round_down(a, b):
    return (a // b) * b


def _tpu_topology():
    """(num TensorCores per chip, VMEM bytes per core). Conservative fallbacks."""
    num_tc, vmem = 1, 0
    try:
        info = pltpu.get_tpu_info()
        for attr in ("vmem_capacity_bytes", "vmem_bytes"):
            v = getattr(info, attr, None)
            if isinstance(v, int) and v > 0:
                vmem = v
                break
        for attr in ("num_tensorcores", "tensorcore_count", "num_cores", "core_count"):
            v = getattr(info, attr, None)
            if isinstance(v, int) and v > 0:
                num_tc = v
                break
    except Exception:
        pass
    try:
        kind = jax.devices()[0].device_kind.lower()
        if "v7" in kind:                  # 2 TensorCores / chip, 64 MiB VMEM per core
            num_tc = max(num_tc, 2)
            vmem = min(vmem, 64 << 20) if vmem else (64 << 20)
    except Exception:
        pass
    return num_tc, vmem


# --------------------------------------------------------------------------
# Kernels
# --------------------------------------------------------------------------
def _log_sparsemax_count_kernel(x_ref, o_ref):
    """Tile (D, TR): sparsemax axis on sublanes, independent rows on lanes."""
    x = x_ref[...].astype(jnp.float32)                # (D, TR)
    D = x.shape[0]
    x = x - jnp.max(x, axis=0, keepdims=True)         # cheap sublane reduction

    # Counting formulation of the sparsemax threshold:
    #   k_j = #{i : x_i >= x_j},  S_j = sum{x_i : x_i >= x_j}
    #   j in support  <=>  k_j * x_j > S_j - 1
    # D is tiny and static -> unrolled; each step is a sublane broadcast + selects.
    # TODO(synk): for D < 8 each f32 vreg uses only D of 8 sublanes; fold 8//D
    # lane-column groups into the sublane axis to restore full vreg occupancy.
    k = jnp.zeros_like(x)
    S = jnp.zeros_like(x)
    for i in range(D):
        xi = x[i:i + 1, :]                            # (1, TR) sublane broadcast
        ge = xi >= x                                  # (D, TR) bool
        k = k + jnp.where(ge, 1.0, 0.0)
        S = S + jnp.where(ge, xi, 0.0)

    supp = k * x > S - 1.0
    supp_size = jnp.sum(jnp.where(supp, 1.0, 0.0), axis=0, keepdims=True)
    tau = (jnp.sum(jnp.where(supp, x, 0.0), axis=0, keepdims=True) - 1.0) / supp_size

    out = jnp.maximum(x - tau, 0.0)                   # sparsemax
    o_ref[...] = jnp.log(out).astype(o_ref.dtype)     # zeros -> -inf, like torch


def _log_sparsemax_bisect_kernel(x_ref, o_ref, *, axis, n_iters):
    """Bisection for the threshold tau along `axis`, then exact re-derivation."""
    x = x_ref[...].astype(jnp.float32)
    x = x - jnp.max(x, axis=axis, keepdims=True)      # per-row max is now 0
    red_shape = list(x.shape)
    red_shape[axis] = 1

    # f(tau) = sum(relu(x - tau)) is decreasing, f(-1) >= 1, f(0) = 0:
    # the sparsemax threshold is the unique root in [-1, 0].
    lo = jnp.full(red_shape, -1.0, dtype=jnp.float32)
    hi = jnp.zeros(red_shape, dtype=jnp.float32)

    def body(_, carry):
        lo, hi = carry
        mid = 0.5 * (lo + hi)
        f = jnp.sum(jnp.maximum(x - mid, 0.0), axis=axis, keepdims=True)
        gt = f > 1.0
        return jnp.where(gt, mid, lo), jnp.where(gt, hi, mid)

    lo, hi = lax.fori_loop(0, n_iters, body, (lo, hi))
    tau_b = 0.5 * (lo + hi)                           # approximate threshold

    # Recover the support and re-derive tau exactly (elements exactly at the
    # threshold contribute 0, so boundary flips only move the result by f32 eps).
    supp = x > tau_b                                  # never empty: max(x) = 0 > tau_b
    supp_size = jnp.sum(jnp.where(supp, 1.0, 0.0), axis=axis, keepdims=True)
    tau = (jnp.sum(jnp.where(supp, x, 0.0), axis=axis, keepdims=True) - 1.0) / supp_size

    out = jnp.maximum(x - tau, 0.0)
    o_ref[...] = jnp.log(out).astype(o_ref.dtype)


# --------------------------------------------------------------------------
# Wrapper paths
# --------------------------------------------------------------------------
def _sublane_major_call(x, lead, D, trail, bisect_budget, multi_tc, vmem_limit):
    """dim is not the last axis: free (lead, D, trail) view, tiles (D, TR)."""
    x3 = x.reshape(lead, D, trail)        # free view: only contiguous axes merged
    use_counting = D <= _SMALL_D_MAX
    budget = _COUNT_TILE_BYTES if use_counting else bisect_budget
    # TODO(synk): extremely large D (D*128*4 >> budget) would need a tiled-D
    # two-pass variant; the whole D extent is kept resident on sublanes here.

    tr = max(128, budget // (D * 4))
    if tr >= trail:
        tr = trail                        # full lane extent: always a legal block
        if multi_tc and lead == 1 and trail >= 256:
            half = _round_up(pl.cdiv(trail, 2), 128)
            if half < trail:
                tr = half                 # give v7x's second TensorCore a block
    else:
        tr = _round_down(tr, 128)         # partial lane tiles must be 128-aligned

    grid = (lead, pl.cdiv(trail, tr))     # ragged last lane tile: Pallas boundary block
    if use_counting:
        kernel = _log_sparsemax_count_kernel
    else:
        kernel = functools.partial(_log_sparsemax_bisect_kernel, axis=0,
                                   n_iters=_BISECT_ITERS)

    spec = pl.BlockSpec((None, D, tr), lambda n, i: (n, 0, i))
    out = pl.pallas_call(
        kernel,
        out_shape=jax.ShapeDtypeStruct((lead, D, trail), x.dtype),
        grid_spec=pltpu.PrefetchScalarGridSpec(
            num_scalar_prefetch=0, grid=grid, in_specs=[spec], out_specs=spec),
        compiler_params=pltpu.CompilerParams(
            dimension_semantics=("parallel",) * len(grid),
            vmem_limit_bytes=vmem_limit),
    )(x3)
    return out.reshape(x.shape)


def _lane_major_call(x, R, D, bisect_budget, multi_tc, vmem_limit):
    """dim is the last axis: rows on sublanes, sparsemax axis on lanes."""
    x2 = x.reshape(R, D)                  # free: the sparsemax axis is last

    if D <= _SMALL_D_MAX:
        # Tiny sparsemax axis that is also the last axis: the lane-dense layout
        # needs rows on lanes, which costs one transpose around the kernel.
        # TODO(synk): fold rows into sublanes instead to avoid this transpose.
        xt = x2.T                                    # (D, R)
        tr = max(128, _COUNT_TILE_BYTES // (D * 4))
        if tr >= R:
            tr = R
            if multi_tc and R >= 256:
                half = _round_up(pl.cdiv(R, 2), 128)
                if half < R:
                    tr = half
        else:
            tr = _round_down(tr, 128)
        grid = (pl.cdiv(R, tr),)
        out = pl.pallas_call(
            _log_sparsemax_count_kernel,
            out_shape=jax.ShapeDtypeStruct((D, R), x.dtype),
            grid_spec=pltpu.PrefetchScalarGridSpec(
                num_scalar_prefetch=0, grid=grid,
                in_specs=[pl.BlockSpec((D, tr), lambda i: (0, i))],
                out_specs=pl.BlockSpec((D, tr), lambda i: (0, i))),
            compiler_params=pltpu.CompilerParams(
                dimension_semantics=("parallel",),
                vmem_limit_bytes=vmem_limit),
        )(xt)
        return out.T.reshape(x.shape)

    itemsize = jnp.dtype(x.dtype).itemsize
    sub = 8 * max(1, 4 // itemsize)       # sublane packing: 8 f32 / 16 bf16

    Dp = _round_up(D, 128)
    if Dp != D:
        # Lane-pad with a large-negative *finite* sentinel (not -inf, which
        # would give inf - inf -> NaN in the max shift) so the output store
        # stays an unmasked lane-dense vst and reductions need no edge masking.
        if jnp.issubdtype(x.dtype, jnp.floating):
            sentinel = float(jnp.finfo(x.dtype).min)
        else:
            sentinel = float(jnp.iinfo(x.dtype).min)
        x2 = jnp.pad(x2, ((0, 0), (0, Dp - D)), constant_values=sentinel)

    tr = min(2048, bisect_budget // (Dp * 4))
    if tr >= R:
        tr = R                            # full sublane extent: always legal
        if multi_tc and R > 2 * sub:
            half = _round_up(pl.cdiv(R, 2), sub)
            if half < R:
                tr = half                 # >= 2 blocks so both v7x cores get work
    else:
        tr = max(sub, _round_down(tr, sub))
    grid = (pl.cdiv(R, tr),)              # ragged last row tile: Pallas boundary block

    out = pl.pallas_call(
        functools.partial(_log_sparsemax_bisect_kernel, axis=-1,
                          n_iters=_BISECT_ITERS),
        out_shape=jax.ShapeDtypeStruct((R, Dp), x.dtype),
        grid_spec=pltpu.PrefetchScalarGridSpec(
            num_scalar_prefetch=0, grid=grid,
            in_specs=[pl.BlockSpec((tr, Dp), lambda i: (i, 0))],
            out_specs=pl.BlockSpec((tr, Dp), lambda i: (i, 0))),
        compiler_params=pltpu.CompilerParams(
            dimension_semantics=("parallel",),
            vmem_limit_bytes=vmem_limit),
    )(x2)
    if Dp != D:
        out = out[:, :D]
    return out.reshape(x.shape)


def log_sparsemax(x, dim=0):
    """log(sparsemax(x, dim)); same shape and dtype as x (forward of LogSparsemax)."""
    ndim = x.ndim
    dim = dim % ndim
    D = int(x.shape[dim])

    lead = 1
    for s in x.shape[:dim]:
        lead *= int(s)
    trail = 1
    for s in x.shape[dim + 1:]:
        trail *= int(s)

    num_tc, vmem_bytes = _tpu_topology()
    multi_tc = num_tc >= 2
    if multi_tc:
        # v7x: 64 MiB VMEM / 32 MiB scoped default -> smaller tiles, default limit.
        bisect_budget, vmem_limit = _BISECT_TILE_BYTES_SMALL, None
    elif vmem_bytes >= (100 << 20):
        # v5e/v6e (128 MiB physical): bigger compute-bound tiles + raised limit.
        bisect_budget, vmem_limit = _BISECT_TILE_BYTES_1TC, 64 << 20
    else:
        # Unknown chip / failed query: stay under the default scoped VMEM limit.
        bisect_budget, vmem_limit = _BISECT_TILE_BYTES_SMALL, None

    if trail > 1:
        return _sublane_major_call(x, lead, D, trail, bisect_budget, multi_tc,
                                   vmem_limit)
    return _lane_major_call(x, lead, D, bisect_budget, multi_tc, vmem_limit)


# --------------------------------------------------------------------------
# Pure-JAX reference (mirrors the PyTorch sort/cumsum implementation)
# --------------------------------------------------------------------------
def _log_sparsemax_ref(x, dim):
    x = jnp.moveaxis(x, dim, -1).astype(jnp.float32)
    x = x - jnp.max(x, axis=-1, keepdims=True)
    d = x.shape[-1]
    xs = -jnp.sort(-x, axis=-1)                       # descending sort
    csum = jnp.cumsum(xs, axis=-1) - 1.0
    rhos = jnp.arange(1, d + 1, dtype=x.dtype)
    supp = rhos * xs > csum
    supp_size = jnp.sum(supp, axis=-1, keepdims=True)
    tau = jnp.take_along_axis(csum, supp_size - 1, axis=-1) / supp_size.astype(x.dtype)
    out = jnp.log(jnp.maximum(x - tau, 0.0))
    return jnp.moveaxis(out, -1, dim)


def _check(y, x, dim):
    r = _log_sparsemax_ref(x, dim)
    assert y.shape == x.shape and y.dtype == x.dtype
    # compare in probability space (exp(-inf) = 0) -> robust at the support
    # boundary, then check log values wherever the probability is not tiny.
    assert bool(jnp.allclose(jnp.exp(y), jnp.exp(r), atol=1e-5))
    m = jnp.exp(r) > 1e-3
    assert bool(jnp.allclose(jnp.where(m, y, 0.0), jnp.where(m, r, 0.0), atol=1e-2))


if __name__ == "__main__":
    key = jax.random.PRNGKey(0)
    k1, k2, k3, k4 = jax.random.split(key, 4)

    # 1) NCHW input, sparsemax over channels (dim=1): tiny-D counting kernel on
    #    the free (lead, D, trail) view -- no transpose/pad/slice HBM traffic.
    x1 = jax.random.normal(k1, (2, 4, 16, 16), dtype=jnp.float32)
    y1 = jax.block_until_ready(log_sparsemax(x1, dim=1))
    _check(y1, x1, 1)

    # 2) Large D on the last axis (seq=8, hidden=256): lane-major bisection.
    x2 = jax.random.normal(k2, (8, 256), dtype=jnp.float32)
    y2 = jax.block_until_ready(log_sparsemax(x2, dim=1))
    _check(y2, x2, 1)

    # 3) Large D on a middle axis: sublane-major bisection, no transpose.
    x3 = jax.random.normal(k3, (2, 64, 16), dtype=jnp.float32)
    y3 = jax.block_until_ready(log_sparsemax(x3, dim=1))
    _check(y3, x3, 1)

    # 4) Tiny D on the last axis: transpose fallback + counting kernel.
    x4 = jax.random.normal(k4, (8, 6), dtype=jnp.float32)
    y4 = jax.block_until_ready(log_sparsemax(x4, dim=1))
    _check(y4, x4, 1)

    print("KERNEL_OK")
</pallas_src>

<mosaic_0001>
module attributes {stable_mosaic.version = 11 : i64} {
  func.func @_log_sparsemax_count_kernel(%arg0: i32, %arg1: i32, %arg2: memref<1x4x256xf32, #tpu.memory_space<vmem>>, %arg3: memref<1x4x256xf32, #tpu.memory_space<vmem>>) attributes {dimension_semantics = [#tpu.dimension_semantics<parallel>, #tpu.dimension_semantics<parallel>], iteration_bounds = array<i64: 2, 1>, scalar_prefetch = 0 : i64, scratch_operands = 0 : i64, tpu.core_type = #tpu.core_type<tc>, window_params = [{transform_indices = @transform_0, window_bounds = array<i64: 1, 4, 256>}, {transform_indices = @transform_1, window_bounds = array<i64: 1, 4, 256>}]} {
    %c0 = arith.constant 0 : index
    %c0_0 = arith.constant 0 : index
    %c0_1 = arith.constant 0 : index
    %0 = vector.load %arg2[%c0, %c0_0, %c0_1] : memref<1x4x256xf32, #tpu.memory_space<vmem>>, vector<1x4x256xf32>
    %1 = vector.shape_cast %0 : vector<1x4x256xf32> to vector<4x256xf32>
    %cst = arith.constant dense<0xFF800000> : vector<256xf32>
    %2 = vector.multi_reduction <maximumf>, %1, %cst [0] : vector<4x256xf32> to vector<256xf32>
    %3 = vector.shape_cast %2 : vector<256xf32> to vector<1x256xf32>
    %4 = vector.broadcast %3 : vector<1x256xf32> to vector<4x256xf32>
    %5 = arith.subf %1, %4 : vector<4x256xf32>
    %cst_2 = arith.constant 0.000000e+00 : f32
    %6 = vector.broadcast %cst_2 : f32 to vector<4x256xf32>
    %cst_3 = arith.constant 0.000000e+00 : f32
    %7 = vector.broadcast %cst_3 : f32 to vector<4x256xf32>
    %8 = vector.extract_strided_slice %5 {offsets = [0, 0], sizes = [1, 256], strides = [1, 1]} : vector<4x256xf32> to vector<1x256xf32>
    %9 = vector.broadcast %8 : vector<1x256xf32> to vector<4x256xf32>
    %10 = arith.cmpf oge, %9, %5 : vector<4x256xf32>
    %cst_4 = arith.constant 1.000000e+00 : f32
    %cst_5 = arith.constant 0.000000e+00 : f32
    %11 = vector.broadcast %cst_4 : f32 to vector<4x256xf32>
    %12 = vector.broadcast %cst_5 : f32 to vector<4x256xf32>
    %13 = arith.select %10, %11, %12 : vector<4x256xi1>, vector<4x256xf32>
    %14 = arith.addf %6, %13 : vector<4x256xf32>
    %cst_6 = arith.constant 0.000000e+00 : f32
    %15 = vector.shape_cast %8 : vector<1x256xf32> to vector<1x256xf32>
    %16 = vector.broadcast %15 : vector<1x256xf32> to vector<4x256xf32>
    %17 = vector.broadcast %cst_6 : f32 to vector<4x256xf32>
    %18 = arith.select %10, %16, %17 : vector<4x256xi1>, vector<4x256xf32>
    %19 = arith.addf %7, %18 : vector<4x256xf32>
    %20 = vector.extract_strided_slice %5 {offsets = [1, 0], sizes = [1, 256], strides = [1, 1]} : vector<4x256xf32> to vector<1x256xf32>
    %21 = vector.broadcast %20 : vector<1x256xf32> to vector<4x256xf32>
    %22 = arith.cmpf oge, %21, %5 : vector<4x256xf32>
    %cst_7 = arith.constant 1.000000e+00 : f32
    %cst_8 = arith.constant 0.000000e+00 : f32
    %23 = vector.broadcast %cst_7 : f32 to vector<4x256xf32>
    %24 = vector.broadcast %cst_8 : f32 to vector<4x256xf32>
    %25 = arith.select %22, %23, %24 : vector<4x256xi1>, vector<4x256xf32>
    %26 = arith.addf %14, %25 : vector<4x256xf32>
    %cst_9 = arith.constant 0.000000e+00 : f32
    %27 = vector.shape_cast %20 : vector<1x256xf32> to vector<1x256xf32>
    %28 = vector.broadcast %27 : vector<1x256xf32> to vector<4x256xf32>
    %29 = vector.broadcast %cst_9 : f32 to vector<4x256xf32>
    %30 = arith.select %22, %28, %29 : vector<4x256xi1>, vector<4x256xf32>
    %31 = arith.addf %19, %30 : vector<4x256xf32>
    %32 = vector.extract_strided_slice %5 {offsets = [2, 0], sizes = [1, 256], strides = [1, 1]} : vector<4x256xf32> to vector<1x256xf32>
    %33 = vector.broadcast %32 : vector<1x256xf32> to vector<4x256xf32>
    %34 = arith.cmpf oge, %33, %5 : vector<4x256xf32>
    %cst_10 = arith.constant 1.000000e+00 : f32
    %cst_11 = arith.constant 0.000000e+00 : f32
    %35 = vector.broadcast %cst_10 : f32 to vector<4x256xf32>
    %36 = vector.broadcast %cst_11 : f32 to vector<4x256xf32>
    %37 = arith.select %34, %35, %36 : vector<4x256xi1>, vector<4x256xf32>
    %38 = arith.addf %26, %37 : vector<4x256xf32>
    %cst_12 = arith.constant 0.000000e+00 : f32
    %39 = vector.shape_cast %32 : vector<1x256xf32> to vector<1x256xf32>
    %40 = vector.broadcast %39 : vector<1x256xf32> to vector<4x256xf32>
    %41 = vector.broadcast %cst_12 : f32 to vector<4x256xf32>
    %42 = arith.select %34, %40, %41 : vector<4x256xi1>, vector<4x256xf32>
    %43 = arith.addf %31, %42 : vector<4x256xf32>
    %44 = vector.extract_strided_slice %5 {offsets = [3, 0], sizes = [1, 256], strides = [1, 1]} : vector<4x256xf32> to vector<1x256xf32>
    %45 = vector.broadcast %44 : vector<1x256xf32> to vector<4x256xf32>
    %46 = arith.cmpf oge, %45, %5 : vector<4x256xf32>
    %cst_13 = arith.constant 1.000000e+00 : f32
    %cst_14 = arith.constant 0.000000e+00 : f32
    %47 = vector.broadcast %cst_13 : f32 to vector<4x256xf32>
    %48 = vector.broadcast %cst_14 : f32 to vector<4x256xf32>
    %49 = arith.select %46, %47, %48 : vector<4x256xi1>, vector<4x256xf32>
    %50 = arith.addf %38, %49 : vector<4x256xf32>
    %cst_15 = arith.constant 0.000000e+00 : f32
    %51 = vector.shape_cast %44 : vector<1x256xf32> to vector<1x256xf32>
    %52 = vector.broadcast %51 : vector<1x256xf32> to vector<4x256xf32>
    %53 = vector.broadcast %cst_15 : f32 to vector<4x256xf32>
    %54 = arith.select %46, %52, %53 : vector<4x256xi1>, vector<4x256xf32>
    %55 = arith.addf %43, %54 : vector<4x256xf32>
    %56 = arith.mulf %50, %5 : vector<4x256xf32>
    %cst_16 = arith.constant 1.000000e+00 : f32
    %57 = vector.broadcast %cst_16 : f32 to vector<4x256xf32>
    %58 = arith.subf %55, %57 : vector<4x256xf32>
    %59 = arith.cmpf ogt, %56, %58 : vector<4x256xf32>
    %cst_17 = arith.constant 1.000000e+00 : f32
    %cst_18 = arith.constant 0.000000e+00 : f32
    %60 = vector.broadcast %cst_17 : f32 to vector<4x256xf32>
    %61 = vector.broadcast %cst_18 : f32 to vector<4x256xf32>
    %62 = arith.select %59, %60, %61 : vector<4x256xi1>, vector<4x256xf32>
    %cst_19 = arith.constant dense<0.000000e+00> : vector<256xf32>
    %63 = vector.multi_reduction <add>, %62, %cst_19 [0] : vector<4x256xf32> to vector<256xf32>
    %64 = vector.shape_cast %63 : vector<256xf32> to vector<1x256xf32>
    %cst_20 = arith.constant 0.000000e+00 : f32
    %65 = vector.broadcast %cst_20 : f32 to vector<4x256xf32>
    %66 = arith.select %59, %5, %65 : vector<4x256xi1>, vector<4x256xf32>
    %cst_21 = arith.constant dense<0.000000e+00> : vector<256xf32>
    %67 = vector.multi_reduction <add>, %66, %cst_21 [0] : vector<4x256xf32> to vector<256xf32>
    %68 = vector.shape_cast %67 : vector<256xf32> to vector<1x256xf32>
    %cst_22 = arith.constant 1.000000e+00 : f32
    %69 = vector.broadcast %cst_22 : f32 to vector<1x256xf32>
    %70 = arith.subf %68, %69 : vector<1x256xf32>
    %71 = arith.divf %70, %64 : vector<1x256xf32>
    %72 = vector.broadcast %71 : vector<1x256xf32> to vector<4x256xf32>
    %73 = arith.subf %5, %72 : vector<4x256xf32>
    %cst_23 = arith.constant 0.000000e+00 : f32
    %74 = vector.broadcast %cst_23 : f32 to vector<4x256xf32>
    %75 = arith.maximumf %73, %74 : vector<4x256xf32>
    %76 = math.log %75 : vector<4x256xf32>
    %c0_24 = arith.constant 0 : index
    %c0_25 = arith.constant 0 : index
    %c0_26 = arith.constant 0 : index
    %77 = vector.load %arg3[%c0_24, %c0_25, %c0_26] : memref<1x4x256xf32, #tpu.memory_space<vmem>>, vector<1x4x256xf32>
    %78 = vector.shape_cast %77 : vector<1x4x256xf32> to vector<4x256xf32>
    %79 = vector.shape_cast %76 : vector<4x256xf32> to vector<1x4x256xf32>
    tpu.vector_store %arg3[%c0_24, %c0_25, %c0_26], %79 {strides = array<i32>} : memref<1x4x256xf32, #tpu.memory_space<vmem>>, vector<1x4x256xf32>,
    return
  }
  func.func @transform_0(%arg0: i32, %arg1: i32) -> (i32, i32, i32) {
    %c0_i32 = arith.constant 0 : i32
    %c0_i32_0 = arith.constant 0 : i32
    return %arg0, %c0_i32, %arg1 : i32, i32, i32
  }
  func.func @transform_1(%arg0: i32, %arg1: i32) -> (i32, i32, i32) {
    %c0_i32 = arith.constant 0 : i32
    %c0_i32_0 = arith.constant 0 : i32
    return %arg0, %c0_i32, %arg1 : i32, i32, i32
  }
}

</mosaic_0001>

<llo_original>
// kernel: tpu_custom_call.1
$region0: #{tpu_custom_call.1}
  #allocation0 [shape = 'u32[]', space=smem, size = 0x4, offset = 0x4, fixed_abs, tag = 'smem constant byte address 0x4 - core index']
  #allocation1 [shape = 'u32[144,128]{1,0:T(1,128)}', space=vmem, size = 0x12000, scoped, tag = 'internal scratch']
  %s0 = inlined_call_operand.hbm [shape: f32[2,4,256], index: 0, kind: input, shape index: {}]
  %s1 = inlined_call_operand.hbm [shape: f32[2,4,256], index: 1, kind: output, shape index: {}]
  %s2 = sld [smem:[#allocation0]]
  $region41: #{tpu_custom_call.1} parent=0
    _
  %s4 = ssub.s32 1, %s2
  %s5 = scalar_select 0, %s4, %s2
  $region1: #{tpu_custom_call.1} parent=0
    #allocation2 [shape = 'u8[8192]{0}', space=vmem, size = 0x2000, scoped, tag = 'input window, operand 0']
    #allocation3 [shape = 's32[2]{0}', space=sflag, size = 0x8, scoped, tag = 'scoped memory for tpu_custom_call.1']
    #allocation4 [shape = 's32[2]{0}', space=sflag, size = 0x8, scoped, tag = 'scoped memory for tpu_custom_call.1']
    #allocation5 [shape = 'u8[8192]{0}', space=vmem, size = 0x2000, scoped, tag = 'output window, operand 0']
    %6 = vsyncpa [#allocation3], 0
    %s7 = scalar_lea.sflag [#allocation3], 1
    %8 = vsyncpa %s7, 0
    %9 = vsyncpa [#allocation4], 0
    %s10 = scalar_lea.sflag [#allocation4], 1
    %11 = vsyncpa %s10, 0
    loop: start=0, step=1, limit=4
    $region2: #{tpu_custom_call.1} parent=1 // loop_pre_header
      _
    $region3: #{tpu_custom_call.1} parent=1 // loop_header
      %s13 = sphi 0, %s17
      %p14 = scmp.ge.s32.totalorder %s13, 4
      %s20 = sphi 0, %s32
      %s21 = sphi 0, %s28
      %s22 = sphi 0, %s20
      %s23 = sphi 0, %s21
      %s24 = sphi 0, %s22
      %s25 = sphi 0, %s23
      %s37 = sphi 0, %s39
      %s40 = sphi 0, %s37
      %s41 = sphi 0, %s40
      %s57 = sphi 0, %s41
      %s65 = sphi 0, %s67
      %s68 = sphi 0, %s65
      %s69 = sphi 0, %s68
      %s85 = sphi 0, %s69
    $region4: #{tpu_custom_call.1} parent=1 // loop_header_branch
      %16 = sbr.rel (%p14) target = $region8
    $region5: #{tpu_custom_call.1} parent=1 // loop_body
      %s18 = ssub.s32 %s13, 1
      %s19 = ssub.s32 %s13, 2
      %s26 = sadd.s32 1, %s21
      %p27 = scmp.ge.s32.totalorder %s26, 1
      %s28 = scalar_select %p27, 0, %s26
      %s29 = sadd.s32 1, %s20
      %s30 = scalar_select %p27, %s29, %s20
      %p31 = scmp.ge.s32.totalorder %s30, 2
      %s32 = scalar_select %p31, 0, %s30
      %s33 = ssub.s32 %s20, %s32
      %s34 = ssub.s32 %s21, %s28
      %s35 = sor.u32 %s33, %s34
      %p36 = scmp.eq.s32.totalorder %s35, 0
      %s38 = sadd.s32 %s37, 1
      %s39 = scalar_select %p36, %s37, %s38
      %p42 = pneg %p36
      %p43 = scmp.eq.s32.totalorder %s13, 1
      %p44 = por %p42, %p43
      %p45 = scmp.ne.s32.totalorder %s37, %s40
      %p46 = scmp.eq.s32.totalorder %s13, 0
      %p47 = por %p45, %p46
      %p48 = scmp.ne.s32.totalorder %s37, %s40
      %p49 = scmp.eq.s32.totalorder %s18, 1
      %p50 = por %p48, %p49
      %p51 = scmp.ne.s32.totalorder %s40, %s41
      %p52 = scmp.eq.s32.totalorder %s18, 0
      %p53 = por %p51, %p52
      %p54 = scmp.ne.s32.totalorder %s40, %s41
      %p55 = scmp.eq.s32.totalorder %s19, 1
      %p56 = por %p54, %p55
      %p58 = scmp.ne.s32.totalorder %s41, %s57
      %p59 = scmp.eq.s32.totalorder %s19, 0
      %p60 = por %p58, %p59
      %s61 = ssub.s32 %s20, %s32
      %s62 = ssub.s32 %s21, %s28
      %s63 = sor.u32 %s61, %s62
      %p64 = scmp.eq.s32.totalorder %s63, 0
      %s66 = sadd.s32 %s65, 1
      %s67 = scalar_select %p64, %s65, %s66
      %p70 = pneg %p64
      %p71 = scmp.eq.s32.totalorder %s13, 1
      %p72 = por %p70, %p71
      %p73 = scmp.ne.s32.totalorder %s65, %s68
      %p74 = scmp.eq.s32.totalorder %s13, 0
      %p75 = por %p73, %p74
      %p76 = scmp.ne.s32.totalorder %s65, %s68
      %p77 = scmp.eq.s32.totalorder %s18, 1
      %p78 = por %p76, %p77
      %p79 = scmp.ne.s32.totalorder %s68, %s69
      %p80 = scmp.eq.s32.totalorder %s18, 0
      %p81 = por %p79, %p80
      %p82 = scmp.ne.s32.totalorder %s68, %s69
      %p83 = scmp.eq.s32.totalorder %s19, 1
      %p84 = por %p82, %p83
      %p86 = scmp.ne.s32.totalorder %s69, %s85
      %p87 = scmp.eq.s32.totalorder %s19, 0
      %p88 = por %p86, %p87
      %p89 = scmp.le.s32.totalorder 1, %s13
      %p90 = scmp.lt.s32.totalorder %s13, 3
      %p91 = pnand %p89, %p90
      %p92 = pneg %p91
      // Predicated region
      $region9: #{tpu_custom_call.1} parent=5 // pred_check
        _
      $region10: #{tpu_custom_call.1} parent=5 // pred_check_branch
        %94 = sbr.rel (%p91) target = $region12
      $region11: #{tpu_custom_call.1} parent=5 // pred_region
        %s95 = ssub.s32 %s13, 1
      $region12: #{tpu_custom_call.1} parent=5 // pred_fallthru
        _
      %p96 = scmp.lt.s32.totalorder %s13, 2
      // Predicated region
      $region13: #{tpu_custom_call.1} parent=5 // pred_check
        %p97 = pneg %p96
      $region14: #{tpu_custom_call.1} parent=5 // pred_check_branch
        %99 = sbr.rel (%p97) target = $region16
      $region15: #{tpu_custom_call.1} parent=5 // pred_region
        // Predicated region
        $region17: #{tpu_custom_call.1} parent=15 // pred_check
          %p100 = pneg %p47
        $region18: #{tpu_custom_call.1} parent=15 // pred_check_branch
          %102 = sbr.rel (%p100) target = $region20
        $region19: #{tpu_custom_call.1} parent=15 // pred_region
          %s103 = sand.u32 %s37, 1
          %s104 = scalar_lea.sflag [#allocation3], %s103
          %s105 = sand.u32 %s37, 1
          %s106 = smul.addr %s105, 8
          %s107 = scalar_lea.vmem [#allocation2], %s106
          %s108 = smul.u32 2, %s21
          %s110 = ssub.s32 128, 128
          %111 = vsyncadd %s104, %s110
          %s112 = smul.addr %s20, 2
          %s113 = sadd.s32 %s108, %s112
          %s114 = smul.addr %s113, 64
          %s115 = scalar_lea.hbm %s0, %s114
          %s117 = sshll.u32 %s107, 4
          %s118 = int_to_ptr.vmem [resolvable:$true] %s117
          %120 = dma.hbm_to_vmem [thread:$0]  %s115, 128, %s118, %s104
        $region20: #{tpu_custom_call.1} parent=15 // pred_fallthru
          _
      $region16: #{tpu_custom_call.1} parent=5 // pred_fallthru
        _
      %p121 = scmp.le.s32.totalorder 1, %s13
      %p122 = scmp.lt.s32.totalorder %s13, 3
      %p123 = pnand %p121, %p122
      %p124 = pneg %p123
      // Predicated region
      $region21: #{tpu_custom_call.1} parent=5 // pred_check
        _
      $region22: #{tpu_custom_call.1} parent=5 // pred_check_branch
        %126 = sbr.rel (%p123) target = $region24
      $region23: #{tpu_custom_call.1} parent=5 // pred_region
        %s127 = ssub.s32 %s13, 1
        %s128 = sand.u32 %s40, 1
        %s129 = scalar_lea.sflag [#allocation3], %s128
        %s130 = sand.u32 %s40, 1
        %s131 = smul.addr %s130, 8
        %s132 = scalar_lea.vmem [#allocation2], %s131
        // Predicated region
        $region25: #{tpu_custom_call.1} parent=23 // pred_check
          %p133 = pneg %p53
        $region26: #{tpu_custom_call.1} parent=23 // pred_check_branch
          %135 = sbr.rel (%p133) target = $region28
        $region27: #{tpu_custom_call.1} parent=23 // pred_region
          %136 = dma.done %s129, 128
        $region28: #{tpu_custom_call.1} parent=23 // pred_fallthru
          _
        %s137 = sand.u32 %s40, 1
        %s138 = scalar_lea.sflag [#allocation3], %s137
        %s139 = sand.u32 %s40, 1
        %s140 = smul.addr %s139, 8
        %s141 = scalar_lea.vmem [#allocation2], %s140
        %p142 = pneg %p53
        %p143 = pneg %p50
        %p144 = pneg %p81
        %p145 = pneg %p78
        %s146 = sand.u32 %s68, 1
        %s147 = scalar_lea.sflag [#allocation4], %s146
        %s148 = sand.u32 %s68, 1
        %s149 = smul.addr %s148, 8
        %s150 = scalar_lea.vmem [#allocation5], %s149
        %s151 = smul.u32 2, %s23
        %s152 = smul.u32 2, %s23
        %v153 = vld [vmem:[%s132] sm:$0xff]
        %v155 = vcombine.high %v153, %v153
        %vm157 = vcmask 1043456
        %v158 = vsel %vm157, %v153, -inf
        %v159 = vrot.slane %v158, 4
        %v160 = vmax.f32 %v158, %v159
        %v161 = vrot.slane %v160, 2
        %v162 = vmax.f32 %v160, %v161
        %v163 = vrot.slane %v162, 1
        %v164 = vmax.f32 %v162, %v163
        %v165 = vsel %vm157, %v155, -inf
        %v166 = vrot.slane %v165, 4
        %v167 = vmax.f32 %v165, %v166
        %v168 = vrot.slane %v167, 2
        %v169 = vmax.f32 %v167, %v168
        %v170 = vrot.slane %v169, 1
        %v171 = vmax.f32 %v169, %v170
        %v174 = vcombine.low %v164, %v171
        %v176 = vsub.f32 %v153, %v174
        %v178 = vlaneseq
        %v179 = vshrl.u32 %v178, 7
        %v180 = vsub.s32 0, %v179
        %v181 = vrot.slane %v176, %v180
        %v182 = vlaneseq
        %v183 = vshrl.u32 %v182, 7
        %v184 = vsub.s32 4, %v183
        %v185 = vrot.slane %v176, %v184
        %v188 = vlaneseq
        %v189 = vshrl.u32 %v188, 7
        %v190 = vsub.s32 0, %v189
        %v191 = vrot.slane %v181, %v190
        %v192 = vlaneseq
        %v193 = vshrl.u32 %v192, 7
        %v194 = vsub.s32 0, %v193
        %v195 = vrot.slane %v185, %v194
        %v196 = vcombine.high %v176, %v176
        %vm198 = vcmp.ge.f32.partialorder %v191, %v176
        %vm199 = vcmp.ge.f32.partialorder %v195, %v196
        %v200 = vsel %vm198, 1.0, 0.0
        %v201 = vsel %vm199, 1.0, 0.0
        %v202 = vadd.f32 %v200, 0.0
        %v203 = vadd.f32 %v201, 0.0
        %v204 = vsel %vm198, %v191, 0.0
        %v205 = vsel %vm199, %v195, 0.0
        %v206 = vadd.f32 %v204, 0.0
        %v207 = vadd.f32 %v205, 0.0
        %v208 = vlaneseq
        %v209 = vshrl.u32 %v208, 7
        %v210 = vsub.s32 1, %v209
        %v211 = vrot.slane %v176, %v210
        %v212 = vlaneseq
        %v213 = vshrl.u32 %v212, 7
        %v214 = vsub.s32 5, %v213
        %v215 = vrot.slane %v176, %v214
        %v218 = vlaneseq
        %v219 = vshrl.u32 %v218, 7
        %v220 = vsub.s32 1, %v219
        %v221 = vrot.slane %v211, %v220
        %v222 = vlaneseq
        %v223 = vshrl.u32 %v222, 7
        %v224 = vsub.s32 1, %v223
        %v225 = vrot.slane %v215, %v224
        %vm226 = vcmp.ge.f32.partialorder %v221, %v176
        %vm227 = vcmp.ge.f32.partialorder %v225, %v196
        %v228 = vsel %vm226, 1.0, 0.0
        %v229 = vsel %vm227, 1.0, 0.0
        %v230 = vadd.f32 %v202, %v228
        %v231 = vadd.f32 %v203, %v229
        %v232 = vsel %vm226, %v221, 0.0
        %v233 = vsel %vm227, %v225, 0.0
        %v234 = vadd.f32 %v206, %v232
        %v235 = vadd.f32 %v207, %v233
        %v236 = vlaneseq
        %v237 = vshrl.u32 %v236, 7
        %v238 = vsub.s32 2, %v237
        %v239 = vrot.slane %v176, %v238
        %v240 = vlaneseq
        %v241 = vshrl.u32 %v240, 7
        %v242 = vsub.s32 6, %v241
        %v243 = vrot.slane %v176, %v242
        %v246 = vlaneseq
        %v247 = vshrl.u32 %v246, 7
        %v248 = vsub.s32 2, %v247
        %v249 = vrot.slane %v239, %v248
        %v250 = vlaneseq
        %v251 = vshrl.u32 %v250, 7
        %v252 = vsub.s32 2, %v251
        %v253 = vrot.slane %v243, %v252
        %vm254 = vcmp.ge.f32.partialorder %v249, %v176
        %vm255 = vcmp.ge.f32.partialorder %v253, %v196
        %v256 = vsel %vm254, 1.0, 0.0
        %v257 = vsel %vm255, 1.0, 0.0
        %v258 = vadd.f32 %v230, %v256
        %v259 = vadd.f32 %v231, %v257
        %v260 = vsel %vm254, %v249, 0.0
        %v261 = vsel %vm255, %v253, 0.0
        %v262 = vadd.f32 %v234, %v260
        %v263 = vadd.f32 %v235, %v261
        %v264 = vlaneseq
        %v265 = vshrl.u32 %v264, 7
        %v266 = vsub.s32 3, %v265
        %v267 = vrot.slane %v176, %v266
        %v268 = vlaneseq
        %v269 = vshrl.u32 %v268, 7
        %v270 = vsub.s32 7, %v269
        %v271 = vrot.slane %v176, %v270
        %v274 = vlaneseq
        %v275 = vshrl.u32 %v274, 7
        %v276 = vsub.s32 3, %v275
        %v277 = vrot.slane %v267, %v276
        %v278 = vlaneseq
        %v279 = vshrl.u32 %v278, 7
        %v280 = vsub.s32 3, %v279
        %v281 = vrot.slane %v271, %v280
        %vm282 = vcmp.ge.f32.partialorder %v277, %v176
        %vm283 = vcmp.ge.f32.partialorder %v281, %v196
        %v284 = vsel %vm282, 1.0, 0.0
        %v285 = vsel %vm283, 1.0, 0.0
        %v286 = vadd.f32 %v258, %v284
        %v287 = vadd.f32 %v259, %v285
        %v288 = vsel %vm282, %v277, 0.0
        %v289 = vsel %vm283, %v281, 0.0
        %v290 = vadd.f32 %v262, %v288
        %v291 = vadd.f32 %v263, %v289
        %v292 = vmul.f32 %v286, %v176
        %v293 = vmul.f32 %v287, %v196
        %v294 = vsub.f32 %v290, 1.0
        %v295 = vsub.f32 %v291, 1.0
        %vm296 = vcmp.gt.f32.partialorder %v292, %v294
        %vm297 = vcmp.gt.f32.partialorder %v293, %v295
        %v298 = vsel %vm296, 1.0, 0.0
        %v299 = vsel %vm297, 1.0, 0.0
        %v300 = vsel %vm157, %v298, 0.0
        %v301 = vrot.slane %v300, 4
        %v302 = vadd.f32 %v300, %v301
        %v303 = vrot.slane %v302, 2
        %v304 = vadd.f32 %v302, %v303
        %v305 = vrot.slane %v304, 1
        %v306 = vadd.f32 %v304, %v305
        %v307 = vsel %vm157, %v299, 0.0
        %v308 = vrot.slane %v307, 4
        %v309 = vadd.f32 %v307, %v308
        %v310 = vrot.slane %v309, 2
        %v311 = vadd.f32 %v309, %v310
        %v312 = vrot.slane %v311, 1
        %v313 = vadd.f32 %v311, %v312
        %v314 = vsel %vm296, %v176, 0.0
        %v315 = vsel %vm297, %v196, 0.0
        %v316 = vsel %vm157, %v314, 0.0
        %v317 = vrot.slane %v316, 4
        %v318 = vadd.f32 %v316, %v317
        %v319 = vrot.slane %v318, 2
        %v320 = vadd.f32 %v318, %v319
        %v321 = vrot.slane %v320, 1
        %v322 = vadd.f32 %v320, %v321
        %v323 = vsel %vm157, %v315, 0.0
        %v324 = vrot.slane %v323, 4
        %v325 = vadd.f32 %v323, %v324
        %v326 = vrot.slane %v325, 2
        %v327 = vadd.f32 %v325, %v326
        %v328 = vrot.slane %v327, 1
        %v329 = vadd.f32 %v327, %v328
        %v330 = vsub.f32 %v322, 1.0
        %v331 = vsub.f32 %v329, 1.0
        %v332 = vrcp.pop %v306
        %v333 = vmul.f32 %v330, %v332
        %v334 = vrcp.pop %v313
        %v335 = vmul.f32 %v331, %v334
        %v338 = vcombine.low %v333, %v335
        %v340 = vsub.f32 %v176, %v338
        %v341 = vmax.f32 %v340, 0.0
        %v342 = vlog2.pop %v341
        %v343 = vmul.f32 %v342, 0.6931472
        %344 = vst [vmem:[%s150] sm:$0xff] %v343
        %s345 = sand.u32 %s68, 1
        %s346 = scalar_lea.sflag [#allocation4], %s345
        %s347 = sand.u32 %s68, 1
        %s348 = smul.addr %s347, 8
        %s349 = scalar_lea.vmem [#allocation5], %s348
        // Predicated region
        $region29: #{tpu_custom_call.1} parent=23 // pred_check
          %p350 = pneg %p78
        $region30: #{tpu_custom_call.1} parent=23 // pred_check_branch
          %352 = sbr.rel (%p350) target = $region32
        $region31: #{tpu_custom_call.1} parent=23 // pred_region
          %s353 = smul.u32 2, %s23
          %s355 = ssub.s32 128, 128
          %356 = vsyncadd %s346, %s355
          %s357 = smul.addr %s22, 2
          %s358 = sadd.s32 %s353, %s357
          %s359 = smul.addr %s358, 64
          %s360 = scalar_lea.hbm %s1, %s359
          %s362 = sshll.u32 %s349, 4
          %s363 = int_to_ptr.vmem [resolvable:$true] %s362
          %365 = dma.vmem_to_hbm [thread:$0]  %s363, 128, %s360, %s346
        $region32: #{tpu_custom_call.1} parent=23 // pred_fallthru
          _
      $region24: #{tpu_custom_call.1} parent=5 // pred_fallthru
        _
      %p366 = scmp.le.s32.totalorder 2, %s13
      // Predicated region
      $region33: #{tpu_custom_call.1} parent=5 // pred_check
        %p367 = pneg %p366
      $region34: #{tpu_custom_call.1} parent=5 // pred_check_branch
        %369 = sbr.rel (%p367) target = $region36
      $region35: #{tpu_custom_call.1} parent=5 // pred_region
        %s370 = ssub.s32 %s13, 2
        // Predicated region
        $region37: #{tpu_custom_call.1} parent=35 // pred_check
          %p371 = pneg %p84
        $region38: #{tpu_custom_call.1} parent=35 // pred_check_branch
          %373 = sbr.rel (%p371) target = $region40
        $region39: #{tpu_custom_call.1} parent=35 // pred_region
          %s374 = sand.u32 %s69, 1
          %s375 = scalar_lea.sflag [#allocation4], %s374
          %s376 = sand.u32 %s69, 1
          %s377 = smul.addr %s376, 8
          %s378 = scalar_lea.vmem [#allocation5], %s377
          %379 = dma.done %s375, 128
        $region40: #{tpu_custom_call.1} parent=35 // pred_fallthru
          _
      $region36: #{tpu_custom_call.1} parent=5 // pred_fallthru
        _
    $region6: #{tpu_custom_call.1} parent=1 // loop_footer
      %s17 = sadd.s32 1, %s13
    $region7: #{tpu_custom_call.1} parent=1 // loop_footer_branch
      %12 = sbr.rel target = $region3
    $region8: #{tpu_custom_call.1} parent=1 // loop_exit
      _
    %380 = vsyncpa [#allocation3], 1
    %s381 = scalar_lea.sflag [#allocation3], 1
    %382 = vsyncpa %s381, 1
    %383 = vsyncpa [#allocation4], 1
    %s384 = scalar_lea.sflag [#allocation4], 1
    %385 = vsyncpa %s384, 1

</llo_original>
